<compile_context>
chip_gen: v7x
topology: tpu7x:2x2x1
jax: 0.10.0
libtpu: 0.0.40
codegen_flags: <defaults>
</compile_context>

<pallas_src>
import jax
import jax.numpy as jnp
from jax.experimental import pallas as pl
from jax.experimental.pallas import tpu as pltpu


def _lrelu(v, slope=0.01):
    # F.leaky_relu default negative_slope = 0.01; max(v, slope*v) == where(v>0, v, slope*v)
    return jnp.maximum(v, slope * v)


def _round_up(n, m):
    return ((n + m - 1) // m) * m


# ----------------------------------------------------------------------------
# Kernel: one fused forward step on a batch tile.
#   u_ref : (TB, t_dim+x_dim+1)  merged [t | x | 1]
#   w1    : (t_dim+x_dim+1, 201) blockdiag(wt1,wx1)+biases, lane 200 = carry
#   w2    : (201, 65)            blockdiag(wt2,wx2)+biases, lane 64  = carry
#   w3    : (65, 72)             lanes 0:50 PT-head pre-act, 50 carry, 64:72 proj
#   pack  : (1, 128)             lanes 0:50 wp4, lane 50 = bp4
#   o_ref : (TB, 16)             lanes 0:8 = rep, lane 8 = out, 9:15 unused
# ----------------------------------------------------------------------------
def cob_kernel(u_ref, w1_ref, w2_ref, w3_ref, pack_ref, o_ref):
    f32 = jnp.float32

    u = u_ref[...]                                                     # (TB, d_in)

    # Fused T/X branches (biases ride on the ones-carry lane, lrelu(1) == 1).
    h1 = _lrelu(jnp.dot(u, w1_ref[...], preferred_element_type=f32))  # (TB, 201)
    h2 = _lrelu(jnp.dot(h1, w2_ref[...], preferred_element_type=f32)) # (TB, 65)
    #   h2 lanes: 0:32 = t_tmp, 32:64 = x_tmp (representation), 64 = 1

    # PT-head layer 1 + projection in a single MXU push.
    y3 = jnp.dot(h2, w3_ref[...], preferred_element_type=f32)         # (TB, 72)

    # Head: lrelu over lanes 0:50 plus the carry lane (lrelu(1)==1), then the
    # 50->1 linear as VPU multiply + XLU lane reduction; bp4 folded via carry.
    h_ext = _lrelu(y3[:, 0:51])                                        # (TB, 51)
    wp4_ext = pack_ref[0:1, 0:51]                                      # (1, 51)
    out = jnp.sum(h_ext * wp4_ext, axis=-1, keepdims=True)             # (TB, 1)

    # Projection of the representation (no activation).
    rep = y3[:, 64:72]                                                 # (TB, 8)

    # Slice-stores; lanes 9:15 of the output block are intentionally left
    # uninitialized (never read by the wrapper).
    o_ref[:, 0:8] = rep
    o_ref[:, 8:9] = out


# ----------------------------------------------------------------------------
# Parameter construction / packing
# ----------------------------------------------------------------------------
def make_params(key, t_dim, x_dim, z_dim=32):
    """Deterministic synthetic parameters (shapes match the PyTorch module)."""
    ks = jax.random.split(key, 14)

    def lin(kw, kb, fan_in, fan_out):
        # uniform(-1/sqrt(fan_in), 1/sqrt(fan_in)), same range as torch default
        bound = 1.0 / jnp.sqrt(jnp.float32(fan_in))
        w = jax.random.uniform(kw, (fan_in, fan_out), jnp.float32, -bound, bound)
        b = jax.random.uniform(kb, (fan_out,), jnp.float32, -bound, bound)
        return w, b

    p = {}
    p["wt1"], p["bt1"] = lin(ks[0], ks[1], t_dim, 100)
    p["wt2"], p["bt2"] = lin(ks[2], ks[3], 100, z_dim)
    p["wx1"], p["bx1"] = lin(ks[4], ks[5], x_dim, 100)
    p["wx2"], p["bx2"] = lin(ks[6], ks[7], 100, z_dim)
    p["wp1"], p["bp1"] = lin(ks[8], ks[9], 2 * z_dim, 50)
    p["wp4"], p["bp4"] = lin(ks[10], ks[11], 50, 1)
    p["wproj"], p["bproj"] = lin(ks[12], ks[13], z_dim, 8)
    return p


def pack_params(p, t_dim, x_dim, z_dim=32):
    """Block-diagonal weight packing with bias folding via a ones-carry lane."""
    f32 = jnp.float32
    d_in = t_dim + x_dim + 1

    # Layer 1: [wt1 | 0 ; 0 | wx1], bias row from the ones lane, carry column.
    w1 = jnp.zeros((d_in, 201), f32)
    w1 = w1.at[0:t_dim, 0:100].set(p["wt1"])
    w1 = w1.at[t_dim:t_dim + x_dim, 100:200].set(p["wx1"])
    w1 = w1.at[d_in - 1, 0:100].set(p["bt1"])
    w1 = w1.at[d_in - 1, 100:200].set(p["bx1"])
    w1 = w1.at[d_in - 1, 200].set(1.0)

    # Layer 2: blockdiag(wt2, wx2), bias row, carry column.
    w2 = jnp.zeros((201, 2 * z_dim + 1), f32)
    w2 = w2.at[0:100, 0:z_dim].set(p["wt2"])
    w2 = w2.at[100:200, z_dim:2 * z_dim].set(p["wx2"])
    w2 = w2.at[200, 0:z_dim].set(p["bt2"])
    w2 = w2.at[200, z_dim:2 * z_dim].set(p["bx2"])
    w2 = w2.at[200, 2 * z_dim].set(1.0)

    # Layer 3: lanes 0:50 = PT-head layer-1 pre-activation (wp1 consumes
    # [t_tmp | x_tmp] directly, bp1 via carry), lane 50 = carry pass-through,
    # lanes 64:72 = projection of x_tmp (wproj + bproj via carry).
    w3 = jnp.zeros((2 * z_dim + 1, 72), f32)
    w3 = w3.at[0:2 * z_dim, 0:50].set(p["wp1"])
    w3 = w3.at[2 * z_dim, 0:50].set(p["bp1"])
    w3 = w3.at[2 * z_dim, 50].set(1.0)
    w3 = w3.at[z_dim:2 * z_dim, 64:72].set(p["wproj"])
    w3 = w3.at[2 * z_dim, 64:72].set(p["bproj"])

    # Final 50->1 head vector, bp4 folded at lane 50 (multiplies the carry).
    pack = jnp.zeros((1, 128), f32)
    pack = pack.at[0, 0:50].set(p["wp4"][:, 0])
    pack = pack.at[0, 50].set(p["bp4"][0])

    return (w1, w2, w3, pack)


# ----------------------------------------------------------------------------
# Wrapper
# ----------------------------------------------------------------------------
def _choose_tile(B, tile_b):
    full = _round_up(max(B, 8), 8)
    tile = min(_round_up(max(tile_b, 8), 8), full)
    # v7x shards the "parallel" batch axis over its 2 TensorCores: once the
    # batch is big enough for the split to beat the ~0.5us fixed per-step
    # cost, make sure there are at least 2 grid steps. Small batches stay a
    # single step (best for single-TC v5e/v6e).
    if full <= tile and B >= 2048:
        tile = _round_up(-(-full // 2), 8)
    return tile


def cob_forward(t, x, packed, *, tile_b=2048):
    """Returns (representation (B,8), out (B,1)) — COB.forward semantics."""
    w1, w2, w3, pack = packed
    if t.ndim == 1:
        t = t.reshape(-1, 1)
    B = t.shape[0]
    d_in = w1.shape[0]

    # Merged batch-tiled operand [t | x | 1]; the ones lane carries the biases.
    u = jnp.concatenate(
        [t.astype(jnp.float32), x.astype(jnp.float32), jnp.ones((B, 1), jnp.float32)],
        axis=1)
    assert u.shape[1] == d_in, (u.shape, d_in)

    tile = _choose_tile(B, tile_b)
    Bp = _round_up(B, tile)
    if Bp != B:
        u = jnp.pad(u, ((0, Bp - B), (0, 0)))   # padded rows compute garbage, sliced off
    grid = (Bp // tile,)

    const = lambda shape: pl.BlockSpec(shape, lambda i: (0, 0))
    flops = 2 * Bp * (d_in * 201 + 201 * 65 + 65 * 72 + 51)
    bytes_accessed = 4 * (Bp * (d_in + 16) + w1.size + w2.size + w3.size + pack.size)

    out_packed = pl.pallas_call(
        cob_kernel,
        out_shape=jax.ShapeDtypeStruct((Bp, 16), jnp.float32),
        grid=grid,
        in_specs=[
            pl.BlockSpec((tile, d_in), lambda i: (i, 0)),   # merged input (batch tiled)
            const(w1.shape), const(w2.shape), const(w3.shape),  # resident weights
            const(pack.shape),                              # [wp4 ; bp4]
        ],
        out_specs=pl.BlockSpec((tile, 16), lambda i: (i, 0)),
        compiler_params=pltpu.CompilerParams(
            dimension_semantics=("parallel",)),
        cost_estimate=pl.CostEstimate(
            flops=flops, transcendentals=0, bytes_accessed=bytes_accessed),
    )(u, w1, w2, w3, pack)

    rep = out_packed[:B, 0:8]
    out = out_packed[:B, 8:9]
    return rep, out


def cob_forward_ref(t, x, p):
    """Plain-JAX reference of the PyTorch forward, for verification."""
    lr = lambda v: jnp.where(v > 0, v, 0.01 * v)
    if t.ndim == 1:
        t = t.reshape(-1, 1)
    t1 = lr(t @ p["wt1"] + p["bt1"])
    t_tmp = lr(t1 @ p["wt2"] + p["bt2"])
    x1 = lr(x @ p["wx1"] + p["bx1"])
    x_tmp = lr(x1 @ p["wx2"] + p["bx2"])
    inputs = jnp.concatenate([t_tmp, x_tmp], axis=1)
    h = lr(inputs @ p["wp1"] + p["bp1"])
    out = h @ p["wp4"] + p["bp4"]
    rep = x_tmp @ p["wproj"] + p["bproj"]
    return rep, out


if __name__ == "__main__":
    key = jax.random.PRNGKey(0)
    k_t, k_x, k_p = jax.random.split(key, 3)

    B, T_DIM, X_DIM = 200, 1, 16        # size=200, t_dim=1, x_dim=16
    t = jax.random.normal(k_t, (B, T_DIM), jnp.float32)
    x = jax.random.normal(k_x, (B, X_DIM), jnp.float32)
    params = make_params(k_p, T_DIM, X_DIM)
    packed = pack_params(params, T_DIM, X_DIM)

    fwd = jax.jit(cob_forward, static_argnames=("tile_b",))
    # tile_b=64 at B=200 -> batch padded to 256, 4 grid steps: exercises both
    # the batch grid and the padding path. Production default is tile_b=2048.
    rep, out = fwd(t, x, packed, tile_b=64)
    jax.block_until_ready((rep, out))

    rep_ref, out_ref = cob_forward_ref(t, x, params)
    assert rep.shape == (B, 8) and out.shape == (B, 1)
    assert jnp.allclose(rep, rep_ref, atol=1e-4, rtol=1e-4), \
        float(jnp.max(jnp.abs(rep - rep_ref)))
    assert jnp.allclose(out, out_ref, atol=1e-4, rtol=1e-4), \
        float(jnp.max(jnp.abs(out - out_ref)))

    # Also exercise the large-batch path with the default tile once.
    rep2, out2 = fwd(t, x, packed)
    jax.block_until_ready((rep2, out2))
    assert jnp.allclose(rep2, rep_ref, atol=1e-4, rtol=1e-4)
    assert jnp.allclose(out2, out_ref, atol=1e-4, rtol=1e-4)

    print("KERNEL_OK")
</pallas_src>

<mosaic_0001>
module attributes {stable_mosaic.version = 11 : i64} {
  func.func @cob_kernel(%arg0: i32, %arg1: memref<64x18xf32, #tpu.memory_space<vmem>>, %arg2: memref<18x201xf32, #tpu.memory_space<vmem>>, %arg3: memref<201x65xf32, #tpu.memory_space<vmem>>, %arg4: memref<65x72xf32, #tpu.memory_space<vmem>>, %arg5: memref<1x128xf32, #tpu.memory_space<vmem>>, %arg6: memref<64x16xf32, #tpu.memory_space<vmem>>) attributes {dimension_semantics = [#tpu.dimension_semantics<parallel>], iteration_bounds = array<i64: 4>, scalar_prefetch = 0 : i64, scratch_operands = 0 : i64, tpu.core_type = #tpu.core_type<tc>, window_params = [{transform_indices = @transform_0, window_bounds = array<i64: 64, 18>}, {pipeline_mode = #tpu.pipeline_mode<synchronous>, transform_indices = @transform_1, window_bounds = array<i64: 18, 201>}, {pipeline_mode = #tpu.pipeline_mode<synchronous>, transform_indices = @transform_2, window_bounds = array<i64: 201, 65>}, {pipeline_mode = #tpu.pipeline_mode<synchronous>, transform_indices = @transform_3, window_bounds = array<i64: 65, 72>}, {pipeline_mode = #tpu.pipeline_mode<synchronous>, transform_indices = @transform_4, window_bounds = array<i64: 1, 128>}, {transform_indices = @transform_5, window_bounds = array<i64: 64, 16>}]} {
    %c0 = arith.constant 0 : index
    %c0_0 = arith.constant 0 : index
    %0 = vector.load %arg1[%c0, %c0_0] : memref<64x18xf32, #tpu.memory_space<vmem>>, vector<64x18xf32>
    %c0_1 = arith.constant 0 : index
    %c0_2 = arith.constant 0 : index
    %1 = vector.load %arg2[%c0_1, %c0_2] : memref<18x201xf32, #tpu.memory_space<vmem>>, vector<18x201xf32>
    %cst = arith.constant dense<0.000000e+00> : vector<64x201xf32>
    %2 = tpu.matmul %0, %1, %cst {dimension_numbers = #tpu.dot_dimension_numbers<[1], [0], [0], [1], [0, 0, 1, 1], [], []>} : vector<64x18xf32>, vector<18x201xf32>, vector<64x201xf32> -> vector<64x201xf32>
    %cst_3 = arith.constant 0.00999999977 : f32
    %3 = vector.broadcast %cst_3 : f32 to vector<64x201xf32>
    %4 = arith.mulf %3, %2 : vector<64x201xf32>
    %5 = arith.maximumf %2, %4 : vector<64x201xf32>
    %c0_4 = arith.constant 0 : index
    %c0_5 = arith.constant 0 : index
    %6 = vector.load %arg3[%c0_4, %c0_5] : memref<201x65xf32, #tpu.memory_space<vmem>>, vector<201x65xf32>
    %cst_6 = arith.constant dense<0.000000e+00> : vector<64x65xf32>
    %7 = tpu.matmul %5, %6, %cst_6 {dimension_numbers = #tpu.dot_dimension_numbers<[1], [0], [0], [1], [0, 0, 1, 1], [], []>} : vector<64x201xf32>, vector<201x65xf32>, vector<64x65xf32> -> vector<64x65xf32>
    %cst_7 = arith.constant 0.00999999977 : f32
    %8 = vector.broadcast %cst_7 : f32 to vector<64x65xf32>
    %9 = arith.mulf %8, %7 : vector<64x65xf32>
    %10 = arith.maximumf %7, %9 : vector<64x65xf32>
    %c0_8 = arith.constant 0 : index
    %c0_9 = arith.constant 0 : index
    %11 = vector.load %arg4[%c0_8, %c0_9] : memref<65x72xf32, #tpu.memory_space<vmem>>, vector<65x72xf32>
    %cst_10 = arith.constant dense<0.000000e+00> : vector<64x72xf32>
    %12 = tpu.matmul %10, %11, %cst_10 {dimension_numbers = #tpu.dot_dimension_numbers<[1], [0], [0], [1], [0, 0, 1, 1], [], []>} : vector<64x65xf32>, vector<65x72xf32>, vector<64x72xf32> -> vector<64x72xf32>
    %13 = vector.extract_strided_slice %12 {offsets = [0, 0], sizes = [64, 51], strides = [1, 1]} : vector<64x72xf32> to vector<64x51xf32>
    %cst_11 = arith.constant 0.00999999977 : f32
    %14 = vector.broadcast %cst_11 : f32 to vector<64x51xf32>
    %15 = arith.mulf %14, %13 : vector<64x51xf32>
    %16 = arith.maximumf %13, %15 : vector<64x51xf32>
    %c0_12 = arith.constant 0 : index
    %c0_13 = arith.constant 0 : index
    %17 = vector.load %arg5[%c0_12, %c0_13] : memref<1x128xf32, #tpu.memory_space<vmem>>, vector<1x51xf32>
    %18 = vector.broadcast %17 : vector<1x51xf32> to vector<64x51xf32>
    %19 = arith.mulf %16, %18 : vector<64x51xf32>
    %cst_14 = arith.constant dense<0.000000e+00> : vector<64xf32>
    %20 = vector.multi_reduction <add>, %19, %cst_14 [1] : vector<64x51xf32> to vector<64xf32>
    %21 = vector.shape_cast %20 : vector<64xf32> to vector<64x1xf32>
    %22 = vector.extract_strided_slice %12 {offsets = [0, 64], sizes = [64, 8], strides = [1, 1]} : vector<64x72xf32> to vector<64x8xf32>
    %c0_15 = arith.constant 0 : index
    %c0_16 = arith.constant 0 : index
    %23 = vector.load %arg6[%c0_15, %c0_16] : memref<64x16xf32, #tpu.memory_space<vmem>>, vector<64x8xf32>
    tpu.vector_store %arg6[%c0_15, %c0_16], %22 {strides = array<i32>} : memref<64x16xf32, #tpu.memory_space<vmem>>, vector<64x8xf32>,
    %c0_17 = arith.constant 0 : index
    %c8 = arith.constant 8 : index
    %24 = vector.load %arg6[%c0_17, %c8] : memref<64x16xf32, #tpu.memory_space<vmem>>, vector<64x1xf32>
    tpu.vector_store %arg6[%c0_17, %c8], %21 {strides = array<i32>} : memref<64x16xf32, #tpu.memory_space<vmem>>, vector<64x1xf32>,
    return
  }
  func.func @transform_0(%arg0: i32) -> (i32, i32) {
    %c0_i32 = arith.constant 0 : i32
    %c0_i32_0 = arith.constant 0 : i32
    return %arg0, %c0_i32 : i32, i32
  }
  func.func @transform_1(%arg0: i32) -> (i32, i32) {
    %c0_i32 = arith.constant 0 : i32
    %c0_i32_0 = arith.constant 0 : i32
    %c0_i32_1 = arith.constant 0 : i32
    return %c0_i32, %c0_i32_0 : i32, i32
  }
  func.func @transform_2(%arg0: i32) -> (i32, i32) {
    %c0_i32 = arith.constant 0 : i32
    %c0_i32_0 = arith.constant 0 : i32
    %c0_i32_1 = arith.constant 0 : i32
    return %c0_i32, %c0_i32_0 : i32, i32
  }
  func.func @transform_3(%arg0: i32) -> (i32, i32) {
    %c0_i32 = arith.constant 0 : i32
    %c0_i32_0 = arith.constant 0 : i32
    %c0_i32_1 = arith.constant 0 : i32
    return %c0_i32, %c0_i32_0 : i32, i32
  }
  func.func @transform_4(%arg0: i32) -> (i32, i32) {
    %c0_i32 = arith.constant 0 : i32
    %c0_i32_0 = arith.constant 0 : i32
    %c0_i32_1 = arith.constant 0 : i32
    return %c0_i32, %c0_i32_0 : i32, i32
  }
  func.func @transform_5(%arg0: i32) -> (i32, i32) {
    %c0_i32 = arith.constant 0 : i32
    %c0_i32_0 = arith.constant 0 : i32
    return %arg0, %c0_i32 : i32, i32
  }
}

</mosaic_0001>

<llo_original>
// kernel: cob_forward.1
$region0: #{cob_forward.1}
  #allocation0 [shape = 'u32[]', space=smem, size = 0x4, offset = 0x4, fixed_abs, tag = 'smem constant byte address 0x4 - core index']
  #allocation1 [shape = 'u32[144,128]{1,0:T(1,128)}', space=vmem, size = 0x12000, scoped, tag = 'internal scratch']
  %s0 = inlined_call_operand.vmem [shape: f32[256,18], index: 0, kind: input, shape index: {}]
  %s1 = inlined_call_operand.vmem [shape: f32[18,201], index: 1, kind: input, shape index: {}]
  %s2 = inlined_call_operand.vmem [shape: f32[201,65], index: 2, kind: input, shape index: {}]
  %s3 = inlined_call_operand.vmem [shape: f32[65,72], index: 3, kind: input, shape index: {}]
  %s4 = inlined_call_operand.vmem [shape: f32[1,128], index: 4, kind: input, shape index: {}]
  %s5 = inlined_call_operand.vmem [shape: f32[256,16], index: 5, kind: output, shape index: {}]
  %s6 = sld [smem:[#allocation0]]
  $region53: #{cob_forward.1} parent=0
    _
  %s8 = ssub.s32 1, %s6
  %s9 = scalar_select 0, %s8, %s6
  loop: start=0, step=1, limit=6
  $region2: #{cob_forward.1} parent=0 // loop_pre_header
    _
  $region3: #{cob_forward.1} parent=0 // loop_header
    %s11 = sphi 0, %s15
    %p12 = scmp.ge.s32.totalorder %s11, 6
    %s21 = sphi 0, %s23
    %s24 = sphi 0, %s21
    %s25 = sphi 0, %s24
    %s41 = sphi 0, %s25
    %s45 = sphi 0, %s45
    %s47 = sphi 0, %s45
    %s48 = sphi 0, %s47
    %s62 = sphi 0, %s48
    %s66 = sphi 0, %s66
    %s68 = sphi 0, %s66
    %s69 = sphi 0, %s68
    %s83 = sphi 0, %s69
    %s87 = sphi 0, %s87
    %s89 = sphi 0, %s87
    %s90 = sphi 0, %s89
    %s104 = sphi 0, %s90
    %s108 = sphi 0, %s108
    %s110 = sphi 0, %s108
    %s111 = sphi 0, %s110
    %s125 = sphi 0, %s111
    %s131 = sphi 0, %s133
    %s134 = sphi 0, %s131
    %s135 = sphi 0, %s134
    %s151 = sphi 0, %s135
  $region4: #{cob_forward.1} parent=0 // loop_header_branch
    %14 = sbr.rel (%p12) target = $region8
  $region5: #{cob_forward.1} parent=0 // loop_body
    %s16 = ssub.s32 %s11, 1
    %s17 = ssub.s32 %s11, 2
    %s18 = sadd.s32 %s11, 1
    %s19 = ssub.s32 %s11, %s18
    %p20 = scmp.eq.s32.totalorder %s19, 0
    %s22 = sadd.s32 %s21, 1
    %s23 = scalar_select %p20, %s21, %s22
    %p26 = pneg %p20
    %p27 = scmp.eq.s32.totalorder %s11, 3
    %p28 = por %p26, %p27
    %p29 = scmp.ne.s32.totalorder %s21, %s24
    %p30 = scmp.eq.s32.totalorder %s11, 0
    %p31 = por %p29, %p30
    %p32 = scmp.ne.s32.totalorder %s21, %s24
    %p33 = scmp.eq.s32.totalorder %s16, 3
    %p34 = por %p32, %p33
    %p35 = scmp.ne.s32.totalorder %s24, %s25
    %p36 = scmp.eq.s32.totalorder %s16, 0
    %p37 = por %p35, %p36
    %p38 = scmp.ne.s32.totalorder %s24, %s25
    %p39 = scmp.eq.s32.totalorder %s17, 3
    %p40 = por %p38, %p39
    %p42 = scmp.ne.s32.totalorder %s25, %s41
    %p43 = scmp.eq.s32.totalorder %s17, 0
    %p44 = por %p42, %p43
    %s46 = sadd.s32 %s45, 1
    %p49 = scmp.eq.s32.totalorder %s11, 3
    %p50 = scmp.ne.s32.totalorder %s45, %s47
    %p51 = scmp.eq.s32.totalorder %s11, 0
    %p52 = por %p50, %p51
    %p53 = scmp.ne.s32.totalorder %s45, %s47
    %p54 = scmp.eq.s32.totalorder %s16, 3
    %p55 = por %p53, %p54
    %p56 = scmp.ne.s32.totalorder %s47, %s48
    %p57 = scmp.eq.s32.totalorder %s16, 0
    %p58 = por %p56, %p57
    %p59 = scmp.ne.s32.totalorder %s47, %s48
    %p60 = scmp.eq.s32.totalorder %s17, 3
    %p61 = por %p59, %p60
    %p63 = scmp.ne.s32.totalorder %s48, %s62
    %p64 = scmp.eq.s32.totalorder %s17, 0
    %p65 = por %p63, %p64
    %s67 = sadd.s32 %s66, 1
    %p70 = scmp.eq.s32.totalorder %s11, 3
    %p71 = scmp.ne.s32.totalorder %s66, %s68
    %p72 = scmp.eq.s32.totalorder %s11, 0
    %p73 = por %p71, %p72
    %p74 = scmp.ne.s32.totalorder %s66, %s68
    %p75 = scmp.eq.s32.totalorder %s16, 3
    %p76 = por %p74, %p75
    %p77 = scmp.ne.s32.totalorder %s68, %s69
    %p78 = scmp.eq.s32.totalorder %s16, 0
    %p79 = por %p77, %p78
    %p80 = scmp.ne.s32.totalorder %s68, %s69
    %p81 = scmp.eq.s32.totalorder %s17, 3
    %p82 = por %p80, %p81
    %p84 = scmp.ne.s32.totalorder %s69, %s83
    %p85 = scmp.eq.s32.totalorder %s17, 0
    %p86 = por %p84, %p85
    %s88 = sadd.s32 %s87, 1
    %p91 = scmp.eq.s32.totalorder %s11, 3
    %p92 = scmp.ne.s32.totalorder %s87, %s89
    %p93 = scmp.eq.s32.totalorder %s11, 0
    %p94 = por %p92, %p93
    %p95 = scmp.ne.s32.totalorder %s87, %s89
    %p96 = scmp.eq.s32.totalorder %s16, 3
    %p97 = por %p95, %p96
    %p98 = scmp.ne.s32.totalorder %s89, %s90
    %p99 = scmp.eq.s32.totalorder %s16, 0
    %p100 = por %p98, %p99
    %p101 = scmp.ne.s32.totalorder %s89, %s90
    %p102 = scmp.eq.s32.totalorder %s17, 3
    %p103 = por %p101, %p102
    %p105 = scmp.ne.s32.totalorder %s90, %s104
    %p106 = scmp.eq.s32.totalorder %s17, 0
    %p107 = por %p105, %p106
    %s109 = sadd.s32 %s108, 1
    %p112 = scmp.eq.s32.totalorder %s11, 3
    %p113 = scmp.ne.s32.totalorder %s108, %s110
    %p114 = scmp.eq.s32.totalorder %s11, 0
    %p115 = por %p113, %p114
    %p116 = scmp.ne.s32.totalorder %s108, %s110
    %p117 = scmp.eq.s32.totalorder %s16, 3
    %p118 = por %p116, %p117
    %p119 = scmp.ne.s32.totalorder %s110, %s111
    %p120 = scmp.eq.s32.totalorder %s16, 0
    %p121 = por %p119, %p120
    %p122 = scmp.ne.s32.totalorder %s110, %s111
    %p123 = scmp.eq.s32.totalorder %s17, 3
    %p124 = por %p122, %p123
    %p126 = scmp.ne.s32.totalorder %s111, %s125
    %p127 = scmp.eq.s32.totalorder %s17, 0
    %p128 = por %p126, %p127
    %s129 = ssub.s32 %s11, %s18
    %p130 = scmp.eq.s32.totalorder %s129, 0
    %s132 = sadd.s32 %s131, 1
    %s133 = scalar_select %p130, %s131, %s132
    %p136 = pneg %p130
    %p137 = scmp.eq.s32.totalorder %s11, 3
    %p138 = por %p136, %p137
    %p139 = scmp.ne.s32.totalorder %s131, %s134
    %p140 = scmp.eq.s32.totalorder %s11, 0
    %p141 = por %p139, %p140
    %p142 = scmp.ne.s32.totalorder %s131, %s134
    %p143 = scmp.eq.s32.totalorder %s16, 3
    %p144 = por %p142, %p143
    %p145 = scmp.ne.s32.totalorder %s134, %s135
    %p146 = scmp.eq.s32.totalorder %s16, 0
    %p147 = por %p145, %p146
    %p148 = scmp.ne.s32.totalorder %s134, %s135
    %p149 = scmp.eq.s32.totalorder %s17, 3
    %p150 = por %p148, %p149
    %p152 = scmp.ne.s32.totalorder %s135, %s151
    %p153 = scmp.eq.s32.totalorder %s17, 0
    %p154 = por %p152, %p153
    %p155 = scmp.le.s32.totalorder 1, %s11
    %p156 = scmp.lt.s32.totalorder %s11, 5
    %p157 = pnand %p155, %p156
    %p158 = pneg %p157
    // Predicated region
    $region9: #{cob_forward.1} parent=5 // pred_check
      _
    $region10: #{cob_forward.1} parent=5 // pred_check_branch
      %160 = sbr.rel (%p157) target = $region12
    $region11: #{cob_forward.1} parent=5 // pred_region
      %s161 = ssub.s32 %s11, 1
      // Predicated region
      $region13: #{cob_forward.1} parent=11 // pred_check
        %p162 = pneg %p58
      $region14: #{cob_forward.1} parent=11 // pred_check_branch
        %164 = sbr.rel (%p162) target = $region16
      $region15: #{cob_forward.1} parent=11 // pred_region
        _
      $region16: #{cob_forward.1} parent=11 // pred_fallthru
        _
      // Predicated region
      $region17: #{cob_forward.1} parent=11 // pred_check
        %p165 = pneg %p79
      $region18: #{cob_forward.1} parent=11 // pred_check_branch
        %167 = sbr.rel (%p165) target = $region20
      $region19: #{cob_forward.1} parent=11 // pred_region
        _
      $region20: #{cob_forward.1} parent=11 // pred_fallthru
        _
      // Predicated region
      $region21: #{cob_forward.1} parent=11 // pred_check
        %p168 = pneg %p100
      $region22: #{cob_forward.1} parent=11 // pred_check_branch
        %170 = sbr.rel (%p168) target = $region24
      $region23: #{cob_forward.1} parent=11 // pred_region
        _
      $region24: #{cob_forward.1} parent=11 // pred_fallthru
        _
      // Predicated region
      $region25: #{cob_forward.1} parent=11 // pred_check
        %p171 = pneg %p121
      $region26: #{cob_forward.1} parent=11 // pred_check_branch
        %173 = sbr.rel (%p171) target = $region28
      $region27: #{cob_forward.1} parent=11 // pred_region
        _
      $region28: #{cob_forward.1} parent=11 // pred_fallthru
        _
    $region12: #{cob_forward.1} parent=5 // pred_fallthru
      _
    %p174 = scmp.lt.s32.totalorder %s11, 4
    // Predicated region
    $region29: #{cob_forward.1} parent=5 // pred_check
      %p175 = pneg %p174
    $region30: #{cob_forward.1} parent=5 // pred_check_branch
      %177 = sbr.rel (%p175) target = $region32
    $region31: #{cob_forward.1} parent=5 // pred_region
      // Predicated region
      $region33: #{cob_forward.1} parent=31 // pred_check
        %p178 = pneg %p31
      $region34: #{cob_forward.1} parent=31 // pred_check_branch
        %180 = sbr.rel (%p178) target = $region36
      $region35: #{cob_forward.1} parent=31 // pred_region
        %s181 = smul.u32 8, %s11
        %p182 = scmp.lt.s32.totalorder %s181, 31
        %s183 = scalar_select %p182, %s181, 31
        %s184 = smul.addr %s183, 8
        %s185 = scalar_lea.vmem %s0, %s184
        %s186 = smul.u32 8, %s11
      $region36: #{cob_forward.1} parent=31 // pred_fallthru
        _
    $region32: #{cob_forward.1} parent=5 // pred_fallthru
      _
    %p187 = scmp.le.s32.totalorder 1, %s11
    %p188 = scmp.lt.s32.totalorder %s11, 5
    %p189 = pnand %p187, %p188
    %p190 = pneg %p189
    // Predicated region
    $region37: #{cob_forward.1} parent=5 // pred_check
      _
    $region38: #{cob_forward.1} parent=5 // pred_check_branch
      %192 = sbr.rel (%p189) target = $region40
    $region39: #{cob_forward.1} parent=5 // pred_region
      %s193 = ssub.s32 %s11, 1
      %s194 = smul.u32 8, %s16
      %p195 = scmp.lt.s32.totalorder %s194, 31
      %s196 = scalar_select %p195, %s194, 31
      %s197 = smul.addr %s196, 8
      %s198 = scalar_lea.vmem %s0, %s197
      %p199 = pneg %p37
      %p200 = pneg %p34
      %p201 = pneg %p58
      %p202 = pneg %p55
      %p203 = pneg %p79
      %p204 = pneg %p76
      %p205 = pneg %p100
      %p206 = pneg %p97
      %p207 = pneg %p121
      %p208 = pneg %p118
      %p209 = pneg %p147
      %p210 = pneg %p144
      %s211 = smul.u32 8, %s16
      %p212 = scmp.lt.s32.totalorder %s211, 31
      %s213 = scalar_select %p212, %s211, 31
      %s214 = smul.addr %s213, 8
      %s215 = scalar_lea.vmem %s5, %s214
      %s216 = smul.u32 8, %s16
      %p217 = scmp.lt.s32.totalorder %s216, 31
      %s218 = scalar_select %p217, %s216, 31
      %s219 = smul.addr %s218, 8
      %s220 = scalar_lea.vmem %s0, %s219
      %s221 = smul.u32 8, %s16
      %s222 = smul.u32 8, %s16
      %p223 = scmp.lt.s32.totalorder %s222, 31
      %s224 = scalar_select %p223, %s222, 31
      %s225 = smul.addr %s224, 8
      %s226 = scalar_lea.vmem %s5, %s225
      %s227 = smul.u32 8, %s16
      %v228 = vld [vmem:[%s220] sm:$0xff]
      %v229 = vld [vmem:[%s220 + $0x8] sm:$0xff]
      %v230 = vld [vmem:[%s220 + $0x10] sm:$0xff]
      %v231 = vld [vmem:[%s220 + $0x18] sm:$0xff]
      %v232 = vld [vmem:[%s220 + $0x20] sm:$0xff]
      %v233 = vld [vmem:[%s220 + $0x28] sm:$0xff]
      %v234 = vld [vmem:[%s220 + $0x30] sm:$0xff]
      %v235 = vld [vmem:[%s220 + $0x38] sm:$0xff]
      %v236 = vld [vmem:[%s1] sm:$0xff]
      %v237 = vld [vmem:[%s1 + $0x8] sm:$0xff]
      %v238 = vld [vmem:[%s1 + $0x10] sm:$0xff]
      %v239 = vld [vmem:[%s1 + $0x18] sm:$0xff]
      %v240 = vld [vmem:[%s1 + $0x20] sm:$0x3]
      %v241 = vld [vmem:[%s1 + $0x28] sm:$0x3]
      %vm242 = vcmask 146432
      %v244 = vsel %vm242, %v228, 0
      %v247 = vsel %vm242, %v229, 0
      %v250 = vsel %vm242, %v230, 0
      %v253 = vsel %vm242, %v231, 0
      %v256 = vsel %vm242, %v232, 0
      %v259 = vsel %vm242, %v233, 0
      %v262 = vsel %vm242, %v234, 0
      %v265 = vsel %vm242, %v235, 0
      %vm267 = vcmask 1041408
      %v269 = vsel %vm267, %v240, 0
      %v272 = vsel %vm267, %v241, 0
      %274 = vmatprep.subr.mxu0 %v237
      %275 = vmatpush1.msra.mxu0 %v236
      %276 = vmatprep.subr.mxu0 %v239
      %277 = vmatpush1.msra.mxu0 %v238
      %278 = vmatprep.subr.mxu0 %v272
      %279 = vmatpush1.msra.mxu0 %v269
      %280 = vmatprep.subr.mxu0 0.0
      %281 = vmatpush1.msra.mxu0 0.0
      %282 = vmatprep.subr.mxu0 0.0
      %283 = vmatpush1.msra.mxu0 0.0
      %284 = vmatprep.subr.mxu0 0.0
      %285 = vmatpush1.msra.mxu0 0.0
      %286 = vmatprep.subr.mxu0 0.0
      %287 = vmatpush1.msra.mxu0 0.0
      %288 = vmatprep.subr.mxu0 0.0
      %289 = vmatpush1.msra.mxu0 0.0
      %290 = vmatprep.subr.mxu0 0.0
      %291 = vmatpush1.msra.mxu0 0.0
      %292 = vmatprep.subr.mxu0 0.0
      %293 = vmatpush1.msra.mxu0 0.0
      %294 = vmatprep.subr.mxu0 0.0
      %295 = vmatpush1.msra.mxu0 0.0
      %296 = vmatprep.subr.mxu0 0.0
      %297 = vmatpush1.msra.mxu0 0.0
      %298 = vmatprep.subr.mxu0 0.0
      %299 = vmatpush1.msra.mxu0 0.0
      %300 = vmatprep.subr.mxu0 0.0
      %301 = vmatpush1.msra.mxu0 0.0
      %302 = vmatprep.subr.mxu0 0.0
      %303 = vmatpush1.msra.mxu0 0.0
      %304 = vmatprep.subr.mxu0 0.0
      %305 = vmatpush1.msra.mxu0 0.0
      %306 = vmatprep.subr.mxu0 0.0
      %307 = vmatpush1.msra.mxu0 0.0
      %308 = vmatprep.subr.mxu0 0.0
      %309 = vmatpush1.msra.mxu0 0.0
      %310 = vmatprep.subr.mxu0 0.0
      %311 = vmatpush1.msra.mxu0 0.0
      %312 = vmatprep.subr.mxu0 0.0
      %313 = vmatpush1.msra.mxu0 0.0
      %314 = vmatprep.subr.mxu0 0.0
      %315 = vmatpush1.msra.mxu0 0.0
      %316 = vmatprep.subr.mxu0 0.0
      %317 = vmatpush1.msra.mxu0 0.0
      %318 = vmatprep.subr.mxu0 0.0
      %319 = vmatpush1.msra.mxu0 0.0
      %320 = vmatprep.subr.mxu0 0.0
      %321 = vmatpush1.msra.mxu0 0.0
      %322 = vmatprep.subr.mxu0 0.0
      %323 = vmatpush1.msra.mxu0 0.0
      %324 = vmatprep.subr.mxu0 0.0
      %325 = vmatpush1.msra.mxu0 0.0
      %326 = vmatprep.subr.mxu0 0.0
      %327 = vmatpush1.msra.mxu0 0.0
      %328 = vmatprep.subr.mxu0 0.0
      %329 = vmatpush1.msra.mxu0 0.0
      %330 = vmatprep.subr.mxu0 0.0
      %331 = vmatpush1.msra.mxu0 0.0
      %332 = vmatprep.subr.mxu0 0.0
      %333 = vmatpush1.msra.mxu0 0.0
      %334 = vmatprep.subr.mxu0 0.0
      %335 = vmatpush1.msra.mxu0 0.0
      %336 = vmatprep.subr.mxu0 0.0
      %337 = vmatpush1.msra.mxu0 0.0
      %338 = vmatprep.mubr.f32.mxu0 0.0
      %339 = vmatmul.mubr.f32.gmra.mrb[0].mxu0 %v244
      %v340 = vpop.f32.mrb[0].mxu0
      %v341 = vadd.f32 0.0, %v340
      %v342 = vpop.f32.mrb[0].mxu0
      %v343 = vadd.f32 0.0, %v342
      %344 = vmatprep.mubr.f32.mxu0 0.0
      %345 = vmatmul.mubr.f32.gmra.mrb[0].mxu0 %v247
      %v346 = vpop.f32.mrb[0].mxu0
      %v347 = vadd.f32 0.0, %v346
      %v348 = vpop.f32.mrb[0].mxu0
      %v349 = vadd.f32 0.0, %v348
      %350 = vmatprep.mubr.f32.mxu0 0.0
      %351 = vmatmul.mubr.f32.gmra.mrb[0].mxu0 %v250
      %v352 = vpop.f32.mrb[0].mxu0
      %v353 = vadd.f32 0.0, %v352
      %v354 = vpop.f32.mrb[0].mxu0
      %v355 = vadd.f32 0.0, %v354
      %356 = vmatprep.mubr.f32.mxu0 0.0
      %357 = vmatmul.mubr.f32.gmra.mrb[0].mxu0 %v253
      %v358 = vpop.f32.mrb[0].mxu0
      %v359 = vadd.f32 0.0, %v358
      %v360 = vpop.f32.mrb[0].mxu0
      %v361 = vadd.f32 0.0, %v360
      %362 = vmatprep.mubr.f32.mxu0 0.0
      %363 = vmatmul.mubr.f32.gmra.mrb[0].mxu0 %v256
      %v364 = vpop.f32.mrb[0].mxu0
      %v365 = vadd.f32 0.0, %v364
      %v366 = vpop.f32.mrb[0].mxu0
      %v367 = vadd.f32 0.0, %v366
      %368 = vmatprep.mubr.f32.mxu0 0.0
      %369 = vmatmul.mubr.f32.gmra.mrb[0].mxu0 %v259
      %v370 = vpop.f32.mrb[0].mxu0
      %v371 = vadd.f32 0.0, %v370
      %v372 = vpop.f32.mrb[0].mxu0
      %v373 = vadd.f32 0.0, %v372
      %374 = vmatprep.mubr.f32.mxu0 0.0
      %375 = vmatmul.mubr.f32.gmra.mrb[0].mxu0 %v262
      %v376 = vpop.f32.mrb[0].mxu0
      %v377 = vadd.f32 0.0, %v376
      %v378 = vpop.f32.mrb[0].mxu0
      %v379 = vadd.f32 0.0, %v378
      %380 = vmatprep.mubr.f32.mxu0 0.0
      %381 = vmatmul.mubr.f32.gmra.mrb[0].mxu0 %v265
      %v382 = vpop.f32.mrb[0].mxu0
      %v383 = vadd.f32 0.0, %v382
      %v384 = vpop.f32.mrb[0].mxu0
      %v385 = vadd.f32 0.0, %v384
      %386 = vdwg.mxu0
      %v387 = vmul.f32 %v341, 0.01
      %v388 = vmul.f32 %v343, 0.01
      %v389 = vmul.f32 %v347, 0.01
      %v390 = vmul.f32 %v349, 0.01
      %v391 = vmul.f32 %v353, 0.01
      %v392 = vmul.f32 %v355, 0.01
      %v393 = vmul.f32 %v359, 0.01
      %v394 = vmul.f32 %v361, 0.01
      %v395 = vmul.f32 %v365, 0.01
      %v396 = vmul.f32 %v367, 0.01
      %v397 = vmul.f32 %v371, 0.01
      %v398 = vmul.f32 %v373, 0.01
      %v399 = vmul.f32 %v377, 0.01
      %v400 = vmul.f32 %v379, 0.01
      %v401 = vmul.f32 %v383, 0.01
      %v402 = vmul.f32 %v385, 0.01
      %v403 = vmax.f32 %v341, %v387
      %v404 = vmax.f32 %v343, %v388
      %v405 = vmax.f32 %v347, %v389
      %v406 = vmax.f32 %v349, %v390
      %v407 = vmax.f32 %v353, %v391
      %v408 = vmax.f32 %v355, %v392
      %v409 = vmax.f32 %v359, %v393
      %v410 = vmax.f32 %v361, %v394
      %v411 = vmax.f32 %v365, %v395
      %v412 = vmax.f32 %v367, %v396
      %v413 = vmax.f32 %v371, %v397
      %v414 = vmax.f32 %v373, %v398
      %v415 = vmax.f32 %v377, %v399
      %v416 = vmax.f32 %v379, %v400
      %v417 = vmax.f32 %v383, %v401
      %v418 = vmax.f32 %v385, %v402
      %v419 = vld [vmem:[%s2] sm:$0xff]
      %v420 = vld [vmem:[%s2 + $0x8] sm:$0xff]
      %v421 = vld [vmem:[%s2 + $0x10] sm:$0xff]
      %v422 = vld [vmem:[%s2 + $0x18] sm:$0xff]
      %v423 = vld [vmem:[%s2 + $0x20] sm:$0xff]
      %v424 = vld [vmem:[%s2 + $0x28] sm:$0xff]
      %v425 = vld [vmem:[%s2 + $0x30] sm:$0xff]
      %v426 = vld [vmem:[%s2 + $0x38] sm:$0xff]
      %v427 = vld [vmem:[%s2 + $0x40] sm:$0xff]
      %v428 = vld [vmem:[%s2 + $0x48] sm:$0xff]
      %v429 = vld [vmem:[%s2 + $0x50] sm:$0xff]
      %v430 = vld [vmem:[%s2 + $0x58] sm:$0xff]
      %v431 = vld [vmem:[%s2 + $0x60] sm:$0xff]
      %v432 = vld [vmem:[%s2 + $0x68] sm:$0xff]
      %v433 = vld [vmem:[%s2 + $0x70] sm:$0xff]
      %v434 = vld [vmem:[%s2 + $0x78] sm:$0xff]
      %v435 = vld [vmem:[%s2 + $0x80] sm:$0xff]
      %v436 = vld [vmem:[%s2 + $0x88] sm:$0xff]
      %v437 = vld [vmem:[%s2 + $0x90] sm:$0xff]
      %v438 = vld [vmem:[%s2 + $0x98] sm:$0xff]
      %v439 = vld [vmem:[%s2 + $0xa0] sm:$0xff]
      %v440 = vld [vmem:[%s2 + $0xa8] sm:$0xff]
      %v441 = vld [vmem:[%s2 + $0xb0] sm:$0xff]
      %v442 = vld [vmem:[%s2 + $0xb8] sm:$0xff]
      %v443 = vld [vmem:[%s2 + $0xc0] sm:$0xff]
      %v444 = vld [vmem:[%s2 + $0xc8] sm:$0x1]
      %vm445 = vcmask 596992
      %v447 = vsel %vm445, %v404, 0
      %v450 = vsel %vm445, %v406, 0
      %v453 = vsel %vm445, %v408, 0
      %v456 = vsel %vm445, %v410, 0
      %v459 = vsel %vm445, %v412, 0
      %v462 = vsel %vm445, %v414, 0
      %v465 = vsel %vm445, %v416, 0
      %v468 = vsel %vm445, %v418, 0
      %vm470 = vcmask 1040384
      %v472 = vsel %vm470, %v444, 0
      %474 = vmatprep.subr.mxu0 0.0
      %475 = vmatpush1.msra.mxu0 %v419
      %476 = vmatprep.subr.mxu0 0.0
      %477 = vmatpush1.msra.mxu0 %v420
      %478 = vmatprep.subr.mxu0 0.0
      %479 = vmatpush1.msra.mxu0 %v421
      %480 = vmatprep.subr.mxu0 0.0
      %481 = vmatpush1.msra.mxu0 %v422
      %482 = vmatprep.subr.mxu0 0.0
      %483 = vmatpush1.msra.mxu0 %v423
      %484 = vmatprep.subr.mxu0 0.0
      %485 = vmatpush1.msra.mxu0 %v424
      %486 = vmatprep.subr.mxu0 0.0
      %487 = vmatpush1.msra.mxu0 %v425
      %488 = vmatprep.subr.mxu0 0.0
      %489 = vmatpush1.msra.mxu0 %v426
      %490 = vmatprep.subr.mxu0 0.0
      %491 = vmatpush1.msra.mxu0 %v427
      %492 = vmatprep.subr.mxu0 0.0
      %493 = vmatpush1.msra.mxu0 %v428
      %494 = vmatprep.subr.mxu0 0.0
      %495 = vmatpush1.msra.mxu0 %v429
      %496 = vmatprep.subr.mxu0 0.0
      %497 = vmatpush1.msra.mxu0 %v430
      %498 = vmatprep.subr.mxu0 0.0
      %499 = vmatpush1.msra.mxu0 %v431
      %500 = vmatprep.subr.mxu0 0.0
      %501 = vmatpush1.msra.mxu0 %v432
      %502 = vmatprep.subr.mxu0 0.0
      %503 = vmatpush1.msra.mxu0 %v433
      %504 = vmatprep.subr.mxu0 0.0
      %505 = vmatpush1.msra.mxu0 %v434
      %506 = vmatprep.subr.mxu0 0.0
      %507 = vmatpush1.msra.mxu0 %v435
      %508 = vmatprep.subr.mxu0 0.0
      %509 = vmatpush1.msra.mxu0 %v436
      %510 = vmatprep.subr.mxu0 0.0
      %511 = vmatpush1.msra.mxu0 %v437
      %512 = vmatprep.subr.mxu0 0.0
      %513 = vmatpush1.msra.mxu0 %v438
      %514 = vmatprep.subr.mxu0 0.0
      %515 = vmatpush1.msra.mxu0 %v439
      %516 = vmatprep.subr.mxu0 0.0
      %517 = vmatpush1.msra.mxu0 %v440
      %518 = vmatprep.subr.mxu0 0.0
      %519 = vmatpush1.msra.mxu0 %v441
      %520 = vmatprep.subr.mxu0 0.0
      %521 = vmatpush1.msra.mxu0 %v442
      %522 = vmatprep.subr.mxu0 0.0
      %523 = vmatpush1.msra.mxu0 %v443
      %524 = vmatprep.subr.mxu0 0.0
      %525 = vmatpush1.msra.mxu0 %v472
      %526 = vmatprep.subr.mxu0 0.0
      %527 = vmatpush1.msra.mxu0 0.0
      %528 = vmatprep.subr.mxu0 0.0
      %529 = vmatpush1.msra.mxu0 0.0
      %530 = vmatprep.subr.mxu0 0.0
      %531 = vmatpush1.msra.mxu0 0.0
      %532 = vmatprep.subr.mxu0 0.0
      %533 = vmatpush1.msra.mxu0 0.0
      %534 = vmatprep.subr.mxu0 0.0
      %535 = vmatpush1.msra.mxu0 0.0
      %536 = vmatprep.subr.mxu0 0.0
      %537 = vmatpush1.msra.mxu0 0.0
      %538 = vmatprep.mubr.f32.mxu0 %v447
      %539 = vmatmul.mubr.f32.gmra.mrb[0].mxu0 %v403
      %v540 = vpop.f32.mrb[0].mxu0
      %v541 = vadd.f32 0.0, %v540
      %v542 = vpop.f32.mrb[0].mxu0
      %543 = vmatprep.mubr.f32.mxu0 %v450
      %544 = vmatmul.mubr.f32.gmra.mrb[0].mxu0 %v405
      %v545 = vpop.f32.mrb[0].mxu0
      %v546 = vadd.f32 0.0, %v545
      %v547 = vpop.f32.mrb[0].mxu0
      %548 = vmatprep.mubr.f32.mxu0 %v453
      %549 = vmatmul.mubr.f32.gmra.mrb[0].mxu0 %v407
      %v550 = vpop.f32.mrb[0].mxu0
      %v551 = vadd.f32 0.0, %v550
      %v552 = vpop.f32.mrb[0].mxu0
      %553 = vmatprep.mubr.f32.mxu0 %v456
      %554 = vmatmul.mubr.f32.gmra.mrb[0].mxu0 %v409
      %v555 = vpop.f32.mrb[0].mxu0
      %v556 = vadd.f32 0.0, %v555
      %v557 = vpop.f32.mrb[0].mxu0
      %558 = vmatprep.mubr.f32.mxu0 %v459
      %559 = vmatmul.mubr.f32.gmra.mrb[0].mxu0 %v411
      %v560 = vpop.f32.mrb[0].mxu0
      %v561 = vadd.f32 0.0, %v560
      %v562 = vpop.f32.mrb[0].mxu0
      %563 = vmatprep.mubr.f32.mxu0 %v462
      %564 = vmatmul.mubr.f32.gmra.mrb[0].mxu0 %v413
      %v565 = vpop.f32.mrb[0].mxu0
      %v566 = vadd.f32 0.0, %v565
      %v567 = vpop.f32.mrb[0].mxu0
      %568 = vmatprep.mubr.f32.mxu0 %v465
      %569 = vmatmul.mubr.f32.gmra.mrb[0].mxu0 %v415
      %v570 = vpop.f32.mrb[0].mxu0
      %v571 = vadd.f32 0.0, %v570
      %v572 = vpop.f32.mrb[0].mxu0
      %573 = vmatprep.mubr.f32.mxu0 %v468
      %574 = vmatmul.mubr.f32.gmra.mrb[0].mxu0 %v417
      %v575 = vpop.f32.mrb[0].mxu0
      %v576 = vadd.f32 0.0, %v575
      %v577 = vpop.f32.mrb[0].mxu0
      %578 = vdwg.mxu0
      %v579 = vmul.f32 %v541, 0.01
      %v580 = vmul.f32 %v546, 0.01
      %v581 = vmul.f32 %v551, 0.01
      %v582 = vmul.f32 %v556, 0.01
      %v583 = vmul.f32 %v561, 0.01
      %v584 = vmul.f32 %v566, 0.01
      %v585 = vmul.f32 %v571, 0.01
      %v586 = vmul.f32 %v576, 0.01
      %v587 = vmax.f32 %v541, %v579
      %v588 = vmax.f32 %v546, %v580
      %v589 = vmax.f32 %v551, %v581
      %v590 = vmax.f32 %v556, %v582
      %v591 = vmax.f32 %v561, %v583
      %v592 = vmax.f32 %v566, %v584
      %v593 = vmax.f32 %v571, %v585
      %v594 = vmax.f32 %v576, %v586
      %v595 = vld [vmem:[%s3] sm:$0xff]
      %v596 = vld [vmem:[%s3 + $0x8] sm:$0xff]
      %v597 = vld [vmem:[%s3 + $0x10] sm:$0xff]
      %v598 = vld [vmem:[%s3 + $0x18] sm:$0xff]
      %v599 = vld [vmem:[%s3 + $0x20] sm:$0xff]
      %v600 = vld [vmem:[%s3 + $0x28] sm:$0xff]
      %v601 = vld [vmem:[%s3 + $0x30] sm:$0xff]
      %v602 = vld [vmem:[%s3 + $0x38] sm:$0xff]
      %v603 = vld [vmem:[%s3 + $0x40] sm:$0x1]
      %vm604 = vcmask 531456
      %v606 = vsel %vm604, %v587, 0
      %v609 = vsel %vm604, %v588, 0
      %v612 = vsel %vm604, %v589, 0
      %v615 = vsel %vm604, %v590, 0
      %v618 = vsel %vm604, %v591, 0
      %v621 = vsel %vm604, %v592, 0
      %v624 = vsel %vm604, %v593, 0
      %v627 = vsel %vm604, %v594, 0
      %v630 = vsel %vm470, %v603, 0
      %632 = vmatprep.subr.mxu0 0.0
      %633 = vmatpush1.msra.mxu0 %v595
      %634 = vmatprep.subr.mxu0 0.0
      %635 = vmatpush1.msra.mxu0 %v596
      %636 = vmatprep.subr.mxu0 0.0
      %637 = vmatpush1.msra.mxu0 %v597
      %638 = vmatprep.subr.mxu0 0.0
      %639 = vmatpush1.msra.mxu0 %v598
      %640 = vmatprep.subr.mxu0 0.0
      %641 = vmatpush1.msra.mxu0 %v599
      %642 = vmatprep.subr.mxu0 0.0
      %643 = vmatpush1.msra.mxu0 %v600
      %644 = vmatprep.subr.mxu0 0.0
      %645 = vmatpush1.msra.mxu0 %v601
      %646 = vmatprep.subr.mxu0 0.0
      %647 = vmatpush1.msra.mxu0 %v602
      %648 = vmatprep.subr.mxu0 0.0
      %649 = vmatpush1.msra.mxu0 %v630
      %650 = vmatprep.subr.mxu0 0.0
      %651 = vmatpush1.msra.mxu0 0.0
      %652 = vmatprep.subr.mxu0 0.0
      %653 = vmatpush1.msra.mxu0 0.0
      %654 = vmatprep.subr.mxu0 0.0
      %655 = vmatpush1.msra.mxu0 0.0
      %656 = vmatprep.subr.mxu0 0.0
      %657 = vmatpush1.msra.mxu0 0.0
      %658 = vmatprep.subr.mxu0 0.0
      %659 = vmatpush1.msra.mxu0 0.0
      %660 = vmatprep.subr.mxu0 0.0
      %661 = vmatpush1.msra.mxu0 0.0
      %662 = vmatprep.subr.mxu0 0.0
      %663 = vmatpush1.msra.mxu0 0.0
      %664 = vmatprep.subr.mxu0 0.0
      %665 = vmatpush1.msra.mxu0 0.0
      %666 = vmatprep.subr.mxu0 0.0
      %667 = vmatpush1.msra.mxu0 0.0
      %668 = vmatprep.subr.mxu0 0.0
      %669 = vmatpush1.msra.mxu0 0.0
      %670 = vmatprep.subr.mxu0 0.0
      %671 = vmatpush1.msra.mxu0 0.0
      %672 = vmatprep.subr.mxu0 0.0
      %673 = vmatpush1.msra.mxu0 0.0
      %674 = vmatprep.subr.mxu0 0.0
      %675 = vmatpush1.msra.mxu0 0.0
      %676 = vmatprep.subr.mxu0 0.0
      %677 = vmatpush1.msra.mxu0 0.0
      %678 = vmatprep.subr.mxu0 0.0
      %679 = vmatpush1.msra.mxu0 0.0
      %680 = vmatprep.subr.mxu0 0.0
      %681 = vmatpush1.msra.mxu0 0.0
      %682 = vmatprep.subr.mxu0 0.0
      %683 = vmatpush1.msra.mxu0 0.0
      %684 = vmatprep.subr.mxu0 0.0
      %685 = vmatpush1.msra.mxu0 0.0
      %686 = vmatprep.subr.mxu0 0.0
      %687 = vmatpush1.msra.mxu0 0.0
      %688 = vmatprep.subr.mxu0 0.0
      %689 = vmatpush1.msra.mxu0 0.0
      %690 = vmatprep.subr.mxu0 0.0
      %691 = vmatpush1.msra.mxu0 0.0
      %692 = vmatprep.subr.mxu0 0.0
      %693 = vmatpush1.msra.mxu0 0.0
      %694 = vmatprep.subr.mxu0 0.0
      %695 = vmatpush1.msra.mxu0 0.0
      %696 = vmatprep.mubr.f32.mxu0 0.0
      %697 = vmatmul.mubr.f32.gmra.mrb[0].mxu0 %v606
      %v698 = vpop.f32.mrb[0].mxu0
      %v699 = vadd.f32 0.0, %v698
      %v700 = vpop.f32.mrb[0].mxu0
      %701 = vmatprep.mubr.f32.mxu0 0.0
      %702 = vmatmul.mubr.f32.gmra.mrb[0].mxu0 %v609
      %v703 = vpop.f32.mrb[0].mxu0
      %v704 = vadd.f32 0.0, %v703
      %v705 = vpop.f32.mrb[0].mxu0
      %706 = vmatprep.mubr.f32.mxu0 0.0
      %707 = vmatmul.mubr.f32.gmra.mrb[0].mxu0 %v612
      %v708 = vpop.f32.mrb[0].mxu0
      %v709 = vadd.f32 0.0, %v708
      %v710 = vpop.f32.mrb[0].mxu0
      %711 = vmatprep.mubr.f32.mxu0 0.0
      %712 = vmatmul.mubr.f32.gmra.mrb[0].mxu0 %v615
      %v713 = vpop.f32.mrb[0].mxu0
      %v714 = vadd.f32 0.0, %v713
      %v715 = vpop.f32.mrb[0].mxu0
      %716 = vmatprep.mubr.f32.mxu0 0.0
      %717 = vmatmul.mubr.f32.gmra.mrb[0].mxu0 %v618
      %v718 = vpop.f32.mrb[0].mxu0
      %v719 = vadd.f32 0.0, %v718
      %v720 = vpop.f32.mrb[0].mxu0
      %721 = vmatprep.mubr.f32.mxu0 0.0
      %722 = vmatmul.mubr.f32.gmra.mrb[0].mxu0 %v621
      %v723 = vpop.f32.mrb[0].mxu0
      %v724 = vadd.f32 0.0, %v723
      %v725 = vpop.f32.mrb[0].mxu0
      %726 = vmatprep.mubr.f32.mxu0 0.0
      %727 = vmatmul.mubr.f32.gmra.mrb[0].mxu0 %v624
      %v728 = vpop.f32.mrb[0].mxu0
      %v729 = vadd.f32 0.0, %v728
      %v730 = vpop.f32.mrb[0].mxu0
      %731 = vmatprep.mubr.f32.mxu0 0.0
      %732 = vmatmul.mubr.f32.gmra.mrb[0].mxu0 %v627
      %v733 = vpop.f32.mrb[0].mxu0
      %v734 = vadd.f32 0.0, %v733
      %v735 = vpop.f32.mrb[0].mxu0
      %736 = vdwg.mxu0
      %v737 = vmul.f32 %v699, 0.01
      %v738 = vmul.f32 %v704, 0.01
      %v739 = vmul.f32 %v709, 0.01
      %v740 = vmul.f32 %v714, 0.01
      %v741 = vmul.f32 %v719, 0.01
      %v742 = vmul.f32 %v724, 0.01
      %v743 = vmul.f32 %v729, 0.01
      %v744 = vmul.f32 %v734, 0.01
      %v745 = vmax.f32 %v699, %v737
      %v746 = vmax.f32 %v704, %v738
      %v747 = vmax.f32 %v709, %v739
      %v748 = vmax.f32 %v714, %v740
      %v749 = vmax.f32 %v719, %v741
      %v750 = vmax.f32 %v724, %v742
      %v751 = vmax.f32 %v729, %v743
      %v752 = vmax.f32 %v734, %v744
      %v753 = vld [vmem:[%s4] sm:$0x1]
      %v755 = vlaneseq
      %v756 = vshrl.u32 %v755, 7
      %v757 = vsub.s32 0, %v756
      %v758 = vrot.slane %v753, %v757
      %v760 = vmul.f32 %v745, %v758
      %v761 = vmul.f32 %v746, %v758
      %v762 = vmul.f32 %v747, %v758
      %v763 = vmul.f32 %v748, %v758
      %v764 = vmul.f32 %v749, %v758
      %v765 = vmul.f32 %v750, %v758
      %v766 = vmul.f32 %v751, %v758
      %v767 = vmul.f32 %v752, %v758
      %vm768 = vcmask 416768
      %v769 = vsel %vm768, %v760, 0.0
      %770 = vadd.xlane.f32.xlu0 %v769
      %v771 = vpop.xlane.xlu0 %770
      %v772 = vsel %vm768, %v761, 0.0
      %773 = vadd.xlane.f32.xlu0 %v772
      %v774 = vpop.xlane.xlu0 %773
      %v775 = vsel %vm768, %v762, 0.0
      %776 = vadd.xlane.f32.xlu0 %v775
      %v777 = vpop.xlane.xlu0 %776
      %v778 = vsel %vm768, %v763, 0.0
      %779 = vadd.xlane.f32.xlu0 %v778
      %v780 = vpop.xlane.xlu0 %779
      %v781 = vsel %vm768, %v764, 0.0
      %782 = vadd.xlane.f32.xlu0 %v781
      %v783 = vpop.xlane.xlu0 %782
      %v784 = vsel %vm768, %v765, 0.0
      %785 = vadd.xlane.f32.xlu0 %v784
      %v786 = vpop.xlane.xlu0 %785
      %v787 = vsel %vm768, %v766, 0.0
      %788 = vadd.xlane.f32.xlu0 %v787
      %v789 = vpop.xlane.xlu0 %788
      %v790 = vsel %vm768, %v767, 0.0
      %791 = vadd.xlane.f32.xlu0 %v790
      %v792 = vpop.xlane.xlu0 %791
      %801 = vrot.lane.b32.xlu0 %v699, 64
      %v802 = vpop.permute.xlu0 %801
      %803 = vrot.lane.b32.xlu0 %v704, 64
      %v804 = vpop.permute.xlu0 %803
      %805 = vrot.lane.b32.xlu0 %v709, 64
      %v806 = vpop.permute.xlu0 %805
      %807 = vrot.lane.b32.xlu0 %v714, 64
      %v808 = vpop.permute.xlu0 %807
      %809 = vrot.lane.b32.xlu0 %v719, 64
      %v810 = vpop.permute.xlu0 %809
      %811 = vrot.lane.b32.xlu0 %v724, 64
      %v812 = vpop.permute.xlu0 %811
      %813 = vrot.lane.b32.xlu0 %v729, 64
      %v814 = vpop.permute.xlu0 %813
      %815 = vrot.lane.b32.xlu0 %v734, 64
      %v816 = vpop.permute.xlu0 %815
      %vm825 = vcmask 64512
      %826 = vst.msk [vmem:[%s226] sm:$0xff] %vm825, %v802
      %827 = vst.msk [vmem:[%s226 + $0x8] sm:$0xff] %vm825, %v804
      %828 = vst.msk [vmem:[%s226 + $0x10] sm:$0xff] %vm825, %v806
      %829 = vst.msk [vmem:[%s226 + $0x18] sm:$0xff] %vm825, %v808
      %830 = vst.msk [vmem:[%s226 + $0x20] sm:$0xff] %vm825, %v810
      %831 = vst.msk [vmem:[%s226 + $0x28] sm:$0xff] %vm825, %v812
      %832 = vst.msk [vmem:[%s226 + $0x30] sm:$0xff] %vm825, %v814
      %833 = vst.msk [vmem:[%s226 + $0x38] sm:$0xff] %vm825, %v816
      %vm834 = vcmask 72768
      %835 = vst.msk [vmem:[%s226] sm:$0xff] %vm834, %v771
      %836 = vst.msk [vmem:[%s226 + $0x8] sm:$0xff] %vm834, %v774
      %837 = vst.msk [vmem:[%s226 + $0x10] sm:$0xff] %vm834, %v777
      %838 = vst.msk [vmem:[%s226 + $0x18] sm:$0xff] %vm834, %v780
      %839 = vst.msk [vmem:[%s226 + $0x20] sm:$0xff] %vm834, %v783
      %840 = vst.msk [vmem:[%s226 + $0x28] sm:$0xff] %vm834, %v786
      %841 = vst.msk [vmem:[%s226 + $0x30] sm:$0xff] %vm834, %v789
      %842 = vst.msk [vmem:[%s226 + $0x38] sm:$0xff] %vm834, %v792
      %s843 = smul.u32 8, %s16
      %p844 = scmp.lt.s32.totalorder %s843, 31
      %s845 = scalar_select %p844, %s843, 31
      %s846 = smul.addr %s845, 8
      %s847 = scalar_lea.vmem %s5, %s846
      // Predicated region
      $region41: #{cob_forward.1} parent=39 // pred_check
        %p848 = pneg %p144
      $region42: #{cob_forward.1} parent=39 // pred_check_branch
        %850 = sbr.rel (%p848) target = $region44
      $region43: #{cob_forward.1} parent=39 // pred_region
        %s851 = smul.u32 8, %s16
      $region44: #{cob_forward.1} parent=39 // pred_fallthru
        _
    $region40: #{cob_forward.1} parent=5 // pred_fallthru
      _
    %p852 = scmp.le.s32.totalorder 2, %s11
    // Predicated region
    $region45: #{cob_forward.1} parent=5 // pred_check
      %p853 = pneg %p852
    $region46: #{cob_forward.1} parent=5 // pred_check_branch
      %855 = sbr.rel (%p853) target = $region48
    $region47: #{cob_forward.1} parent=5 // pred_region
      %s856 = ssub.s32 %s11, 2
      // Predicated region
      $region49: #{cob_forward.1} parent=47 // pred_check
        %p857 = pneg %p150
      $region50: #{cob_forward.1} parent=47 // pred_check_branch
        %859 = sbr.rel (%p857) target = $region52
      $region51: #{cob_forward.1} parent=47 // pred_region
        %s860 = smul.u32 8, %s17
        %p861 = scmp.lt.s32.totalorder %s860, 31
        %s862 = scalar_select %p861, %s860, 31
        %s863 = smul.addr %s862, 8
        %s864 = scalar_lea.vmem %s5, %s863
      $region52: #{cob_forward.1} parent=47 // pred_fallthru
        _
    $region48: #{cob_forward.1} parent=5 // pred_fallthru
      _
  $region6: #{cob_forward.1} parent=0 // loop_footer
    %s15 = sadd.s32 1, %s11
  $region7: #{cob_forward.1} parent=0 // loop_footer_branch
    %10 = sbr.rel target = $region3
  $region8: #{cob_forward.1} parent=0 // loop_exit
    _

</llo_original>
